<compile_context>
chip_gen: v7x
topology: tpu7x:2x2x1
jax: 0.10.0
libtpu: 0.0.40
codegen_flags: <defaults>
</compile_context>

<pallas_src>
import jax
import jax.numpy as jnp
from jax.experimental import pallas as pl
from jax.experimental.pallas import tpu as pltpu


def _round_up(x, m):
    return ((x + m - 1) // m) * m


def _cdiv(a, b):
    return (a + b - 1) // b


def _input_features_kernel(idx_ref,    # SMEM (L,)  int32  gather indices
                           mask_ref,   # SMEM (L,)  int32  zero-mask (1 = zero row)
                           emb_hbm,    # ANY  (n_nodes, E)  embedding table
                           ef_hbm,     # ANY  (n_nodes, F)  external features
                           w1_ref,     # VMEM (F, H) resident
                           b1_ref,     # VMEM (1, H) resident
                           w2_ref,     # VMEM (H, H) resident
                           b2_ref,     # VMEM (1, H) resident
                           out_ref,    # VMEM (T, E + H) output block
                           emb_buf,    # VMEM scratch (T, E)
                           ef_buf,     # VMEM scratch (T, F)
                           sem):       # DMA semaphores (2,)
    tile, e_dim = emb_buf.shape
    base = pl.program_id(0) * tile

    # masked_fill_ fused into the gather: pre-zero the embedding scratch;
    # zero-masked rows never get a DMA, so they stay zero.
    emb_buf[...] = jnp.zeros(emb_buf.shape, emb_buf.dtype)

    # ---- fused row gather: one row DMA per (row, table) ----------------------
    @pl.loop(0, tile)
    def _issue(r):
        row = idx_ref[base + r]
        pltpu.make_async_copy(ef_hbm.at[pl.ds(row, 1), :],
                              ef_buf.at[pl.ds(r, 1), :],
                              sem.at[1]).start()

        @pl.when(mask_ref[base + r] == 0)
        def _():
            pltpu.make_async_copy(emb_hbm.at[pl.ds(row, 1), :],
                                  emb_buf.at[pl.ds(r, 1), :],
                                  sem.at[0]).start()

    # Drain: wait counts are issued with the exact same per-row condition, so
    # starts and waits always match 1:1 (no deadlock); buffers are only read
    # after the full drain loop, by which point every DMA has landed.
    @pl.loop(0, tile)
    def _drain(r):
        pltpu.make_async_copy(ef_hbm.at[pl.ds(0, 1), :],
                              ef_buf.at[pl.ds(r, 1), :],
                              sem.at[1]).wait()

        @pl.when(mask_ref[base + r] == 0)
        def _():
            pltpu.make_async_copy(emb_hbm.at[pl.ds(0, 1), :],
                                  emb_buf.at[pl.ds(r, 1), :],
                                  sem.at[0]).wait()

    # ---- ExternalFeatures.transform: W2(relu(W1 x + b1)) + b2 ----------------
    h = jnp.dot(ef_buf[...], w1_ref[...],
                preferred_element_type=jnp.float32) + b1_ref[...].astype(jnp.float32)
    h = jnp.maximum(h, 0.0)                                   # activation = relu
    ext = jnp.dot(h.astype(w2_ref.dtype), w2_ref[...],
                  preferred_element_type=jnp.float32) + b2_ref[...].astype(jnp.float32)

    # ---- concat([masked_emb, ext], -1) as two slab stores --------------------
    out_ref[:, :e_dim] = emb_buf[...].astype(out_ref.dtype)
    out_ref[:, e_dim:] = ext.astype(out_ref.dtype)


def _pick_tiling(n, e, f, h, emb_isz, ef_isz, out_isz, w_isz):
    """Generation/dtype-aware row-tile selection.

    Accounts for double-buffered resident weights and the double-buffered
    output block (BlockSpec pipelining) plus the single-buffered gather
    scratch; balances tiles so the last block is nearly full and keeps >=2
    grid steps when possible (v7x has 2 TensorCores sharing the parallel axis).
    """
    # sub-32-bit dtypes pack 2/4 rows per sublane -> keep packed rows whole.
    align = max(8, 32 // max(1, min(emb_isz, ef_isz, out_isz)))

    try:
        vmem_cap = pltpu.get_tpu_info().vmem_capacity_bytes
    except Exception:
        vmem_cap = 64 << 20                       # v7x-safe fallback
    vmem_budget = min(vmem_cap // 2, 48 << 20)    # ~48 MiB on v5e/v6e, ~32 MiB on v7x

    weights_bytes = 2 * (f * h + h * h + 2 * h) * w_isz          # double-buffered
    per_row = 2 * (e + h) * out_isz + e * emb_isz + f * ef_isz   # out dbl-buf + scratch
    avail = max(int(0.75 * vmem_budget) - weights_bytes, align * per_row)
    tile_cap = max(align, min(1024, (avail // per_row) // align * align))

    k = max(1, _cdiv(n, tile_cap))
    if n >= 2 * align:
        k = max(k, 2)                             # give both v7x cores work
    tile = _round_up(_cdiv(n, k), align)
    num_tiles = _cdiv(n, tile)
    return tile, num_tiles, vmem_budget


def input_features_forward(idx, emb_table, efeats, w1, b1, w2, b2, *,
                           p_zero=0.2, p_freeze=0.0, rng_key=None, masked=True):
    """JAX/Pallas equivalent of InputFeatures.forward(idx, masked=...)."""
    n = int(idx.shape[0])
    e_dim = emb_table.shape[1]
    f_dim = efeats.shape[1]
    h_dim = w1.shape[1]

    # --- mask generation (torch.rand(len) < p) -- tiny (N,) glue, plain JAX ---
    if masked:
        if rng_key is None:
            rng_key = jax.random.PRNGKey(0)
        kz, kf = jax.random.split(rng_key)
        mask_zero = (jax.random.uniform(kz, (n,)) < p_zero) if p_zero > 0.0 else None
        mask_freeze = (jax.random.uniform(kf, (n,)) < p_freeze) if p_freeze > 0.0 else None
    else:
        mask_zero, mask_freeze = None, None

    out_dtype = emb_table.dtype
    emb_isz = jnp.dtype(emb_table.dtype).itemsize
    ef_isz = jnp.dtype(efeats.dtype).itemsize
    out_isz = jnp.dtype(out_dtype).itemsize
    w_isz = jnp.dtype(w1.dtype).itemsize

    tile, num_tiles, vmem_budget = _pick_tiling(
        n, e_dim, f_dim, h_dim, emb_isz, ef_isz, out_isz, w_isz)
    padded_len = num_tiles * tile
    pad = padded_len - n

    # --- scalar-prefetch tables (SMEM): gather indices + zero-mask ------------
    # TODO(synk): for very large batches (>~100K rows) chunk the call so the
    # SMEM-resident idx/mask arrays stay within scalar-memory limits.
    idx32 = idx.astype(jnp.int32)
    mask32 = (mask_zero.astype(jnp.int32) if mask_zero is not None
              else jnp.zeros((n,), jnp.int32))
    if pad:
        idx32 = jnp.pad(idx32, (0, pad))                        # valid row 0
        mask32 = jnp.pad(mask32, (0, pad), constant_values=1)   # skip emb DMA

    b1_2d = b1.reshape(1, -1).astype(w1.dtype)
    b2_2d = b2.reshape(1, -1).astype(w2.dtype)

    flops = 2 * padded_len * (f_dim * h_dim + h_dim * h_dim)
    bytes_accessed = (n * (e_dim * emb_isz + f_dim * ef_isz)
                      + n * (e_dim + h_dim) * out_isz
                      + (f_dim * h_dim + h_dim * h_dim + 2 * h_dim) * w_isz)

    grid_spec = pltpu.PrefetchScalarGridSpec(
        num_scalar_prefetch=2,
        grid=(num_tiles,),
        in_specs=[
            pl.BlockSpec(memory_space=pl.ANY),                    # emb table (HBM)
            pl.BlockSpec(memory_space=pl.ANY),                    # external feats (HBM)
            pl.BlockSpec((f_dim, h_dim), lambda i, *_: (0, 0)),   # W1 (resident)
            pl.BlockSpec((1, h_dim), lambda i, *_: (0, 0)),       # b1 (resident)
            pl.BlockSpec((h_dim, h_dim), lambda i, *_: (0, 0)),   # W2 (resident)
            pl.BlockSpec((1, h_dim), lambda i, *_: (0, 0)),       # b2 (resident)
        ],
        out_specs=pl.BlockSpec((tile, e_dim + h_dim), lambda i, *_: (i, 0)),
        scratch_shapes=[
            pltpu.VMEM((tile, e_dim), emb_table.dtype),           # gathered emb rows
            pltpu.VMEM((tile, f_dim), efeats.dtype),              # gathered ext feats
            pltpu.SemaphoreType.DMA((2,)),
        ],
    )

    feats = pl.pallas_call(
        _input_features_kernel,
        out_shape=jax.ShapeDtypeStruct((n, e_dim + h_dim), out_dtype),
        grid_spec=grid_spec,
        compiler_params=pltpu.CompilerParams(
            dimension_semantics=("parallel",),
            vmem_limit_bytes=vmem_budget),
        cost_estimate=pl.CostEstimate(
            flops=flops, transcendentals=0, bytes_accessed=bytes_accessed),
    )(idx32, mask32, emb_table, efeats, w1, b1_2d, w2, b2_2d)

    return feats, mask_zero, mask_freeze


def _xavier_normal(key, shape):
    # torch.nn.init.xavier_normal_ equivalent; weights stored (fan_in, fan_out)
    # so the kernel computes x @ W.
    fan_in, fan_out = shape
    std = (2.0 / (fan_in + fan_out)) ** 0.5
    return std * jax.random.normal(key, shape, dtype=jnp.float32)


if __name__ == "__main__":
    # Small deterministic setup consistent with the module:
    #   n_nodes=32, emb_dim E=32, external feature dim F=16, efeats_dim H=32
    #   idx: 16 target node indices, p_zero=0.2, p_freeze=0.0, activation='relu'
    n_nodes, emb_dim = 32, 32
    f_in, h_dim = 16, 32
    batch = 16

    key = jax.random.PRNGKey(0)
    k_emb, k_ef, k_w1, k_b1, k_w2, k_b2, k_idx, k_mask = jax.random.split(key, 8)

    emb_table = _xavier_normal(k_emb, (n_nodes, emb_dim))          # nn.Embedding
    efeats = jax.random.normal(k_ef, (n_nodes, f_in), dtype=jnp.float32)
    w1 = _xavier_normal(k_w1, (f_in, h_dim))
    b1 = 0.01 * jax.random.normal(k_b1, (h_dim,), dtype=jnp.float32)
    w2 = _xavier_normal(k_w2, (h_dim, h_dim))
    b2 = 0.01 * jax.random.normal(k_b2, (h_dim,), dtype=jnp.float32)

    idx = jax.random.randint(k_idx, (batch,), 0, n_nodes)

    feats, mask_zero, mask_freeze = input_features_forward(
        idx, emb_table, efeats, w1, b1, w2, b2,
        p_zero=0.2, p_freeze=0.0, rng_key=k_mask, masked=True)
    feats = jax.block_until_ready(feats)

    # Reference: masked embedding ++ W2(relu(W1 x + b1)) + b2, using the same
    # (wrapper-generated) random zero-mask.
    emb_g = emb_table[idx]
    ef_g = efeats[idx]
    emb_ref = jnp.where(mask_zero[:, None], 0.0, emb_g)
    ext_ref = jnp.maximum(ef_g @ w1 + b1, 0.0) @ w2 + b2
    ref = jnp.concatenate([emb_ref, ext_ref], axis=-1)

    assert feats.shape == (batch, emb_dim + h_dim)
    assert mask_zero.shape == (batch,)
    assert mask_freeze is None
    # Loose-ish tolerance to accommodate MXU f32 (multi-pass) vs XLA
    # default-precision matmul differences on real TPUs.
    assert jnp.allclose(feats, ref, atol=1e-2, rtol=1e-2), \
        float(jnp.max(jnp.abs(feats - ref)))
    print("KERNEL_OK")
</pallas_src>

<mosaic_0001>
module attributes {stable_mosaic.version = 11 : i64} {
  func.func @_input_features_kernel(%arg0: i32, %arg1: memref<16xi32, #tpu.memory_space<smem>>, %arg2: memref<16xi32, #tpu.memory_space<smem>>, %arg3: memref<32x32xf32, #tpu.memory_space<any>>, %arg4: memref<32x16xf32, #tpu.memory_space<any>>, %arg5: memref<16x32xf32, #tpu.memory_space<vmem>>, %arg6: memref<1x32xf32, #tpu.memory_space<vmem>>, %arg7: memref<32x32xf32, #tpu.memory_space<vmem>>, %arg8: memref<1x32xf32, #tpu.memory_space<vmem>>, %arg9: memref<8x64xf32, #tpu.memory_space<vmem>>, %arg10: memref<8x32xf32, #tpu.memory_space<vmem>>, %arg11: memref<8x16xf32, #tpu.memory_space<vmem>>, %arg12: memref<2x!tpu.dma_semaphore, #tpu.memory_space<semaphore_mem>>) attributes {dimension_semantics = [#tpu.dimension_semantics<parallel>], iteration_bounds = array<i64: 2>, scalar_prefetch = 2 : i64, scratch_operands = 3 : i64, tpu.core_type = #tpu.core_type<tc>, window_params = [{}, {}, {pipeline_mode = #tpu.pipeline_mode<synchronous>, transform_indices = @transform_2, window_bounds = array<i64: 16, 32>}, {pipeline_mode = #tpu.pipeline_mode<synchronous>, transform_indices = @transform_3, window_bounds = array<i64: 1, 32>}, {pipeline_mode = #tpu.pipeline_mode<synchronous>, transform_indices = @transform_4, window_bounds = array<i64: 32, 32>}, {pipeline_mode = #tpu.pipeline_mode<synchronous>, transform_indices = @transform_5, window_bounds = array<i64: 1, 32>}, {transform_indices = @transform_6, window_bounds = array<i64: 8, 64>}]} {
    %c8_i32 = arith.constant 8 : i32
    %0 = arith.muli %arg0, %c8_i32 : i32
    %cst = arith.constant 0.000000e+00 : f32
    %1 = vector.broadcast %cst : f32 to vector<8x32xf32>
    %c0 = arith.constant 0 : index
    %c0_0 = arith.constant 0 : index
    %2 = vector.load %arg10[%c0, %c0_0] : memref<8x32xf32, #tpu.memory_space<vmem>>, vector<8x32xf32>
    tpu.vector_store %arg10[%c0, %c0_0], %1 {strides = array<i32>} : memref<8x32xf32, #tpu.memory_space<vmem>>, vector<8x32xf32>,
    %c0_i32 = arith.constant 0 : i32
    %c8_i32_1 = arith.constant 8 : i32
    %3 = arith.addi %c0_i32, %c8_i32_1 : i32
    %c1_i32 = arith.constant 1 : i32
    scf.for %arg13 = %c0_i32 to %3 step %c1_i32  : i32 {
      %c1_i32_25 = arith.constant 1 : i32
      %21 = arith.muli %arg13, %c1_i32_25 : i32
      %c0_i32_26 = arith.constant 0 : i32
      %22 = arith.addi %c0_i32_26, %21 : i32
      %23 = arith.addi %0, %22 : i32
      %24 = arith.index_cast %23 : i32 to index
      %25 = memref.load %arg1[%24] : memref<16xi32, #tpu.memory_space<smem>>
      %c1_i32_27 = arith.constant 1 : i32
      %c0_i32_28 = arith.constant 0 : i32
      %26 = tpu.memref_slice %arg4[%25, %c0_i32_28] : memref<32x16xf32, #tpu.memory_space<any>> -> memref<1x16xf32, #tpu.memory_space<any>>
      %c0_i32_29 = arith.constant 0 : i32
      %27 = tpu.memref_slice %arg11[%22, %c0_i32_29] : memref<8x16xf32, #tpu.memory_space<vmem>> -> memref<1x16xf32, #tpu.memory_space<vmem>>
      %28 = tpu.memref_slice %arg12[%c1_i32_27] : memref<2x!tpu.dma_semaphore, #tpu.memory_space<semaphore_mem>> -> memref<1x!tpu.dma_semaphore, #tpu.memory_space<semaphore_mem>>
      %29 = tpu.memref_squeeze %28 : memref<1x!tpu.dma_semaphore, #tpu.memory_space<semaphore_mem>> -> memref<!tpu.dma_semaphore, #tpu.memory_space<semaphore_mem>>
      tpu.enqueue_dma source(%26 : memref<1x16xf32, #tpu.memory_space<any>>) target(%27 : memref<1x16xf32, #tpu.memory_space<vmem>>) target_semaphore(%29 : memref<!tpu.dma_semaphore, #tpu.memory_space<semaphore_mem>>)
      %30 = arith.addi %0, %22 : i32
      %31 = arith.index_cast %30 : i32 to index
      %32 = memref.load %arg2[%31] : memref<16xi32, #tpu.memory_space<smem>>
      %c0_i32_30 = arith.constant 0 : i32
      %33 = arith.cmpi eq, %32, %c0_i32_30 : i32
      %34 = arith.extui %33 : i1 to i32
      %c0_i32_31 = arith.constant 0 : i32
      %35 = arith.cmpi ne, %34, %c0_i32_31 : i32
      scf.if %35 {
        %c0_i32_32 = arith.constant 0 : i32
        %c0_i32_33 = arith.constant 0 : i32
        %36 = tpu.memref_slice %arg3[%25, %c0_i32_33] : memref<32x32xf32, #tpu.memory_space<any>> -> memref<1x32xf32, #tpu.memory_space<any>>
        %c0_i32_34 = arith.constant 0 : i32
        %37 = tpu.memref_slice %arg10[%22, %c0_i32_34] : memref<8x32xf32, #tpu.memory_space<vmem>> -> memref<1x32xf32, #tpu.memory_space<vmem>>
        %38 = tpu.memref_slice %arg12[%c0_i32_32] : memref<2x!tpu.dma_semaphore, #tpu.memory_space<semaphore_mem>> -> memref<1x!tpu.dma_semaphore, #tpu.memory_space<semaphore_mem>>
        %39 = tpu.memref_squeeze %38 : memref<1x!tpu.dma_semaphore, #tpu.memory_space<semaphore_mem>> -> memref<!tpu.dma_semaphore, #tpu.memory_space<semaphore_mem>>
        tpu.enqueue_dma source(%36 : memref<1x32xf32, #tpu.memory_space<any>>) target(%37 : memref<1x32xf32, #tpu.memory_space<vmem>>) target_semaphore(%39 : memref<!tpu.dma_semaphore, #tpu.memory_space<semaphore_mem>>)
      } else {
      }
    }
    %c8_i32_2 = arith.constant 8 : i32
    %c0_i32_3 = arith.constant 0 : i32
    %c8_i32_4 = arith.constant 8 : i32
    %4 = arith.addi %c0_i32_3, %c8_i32_4 : i32
    %c1_i32_5 = arith.constant 1 : i32
    scf.for %arg13 = %c0_i32_3 to %4 step %c1_i32_5  : i32 {
      %c1_i32_25 = arith.constant 1 : i32
      %21 = arith.muli %arg13, %c1_i32_25 : i32
      %c0_i32_26 = arith.constant 0 : i32
      %22 = arith.addi %c0_i32_26, %21 : i32
      %c1_i32_27 = arith.constant 1 : i32
      %c0_i32_28 = arith.constant 0 : i32
      %c0_i32_29 = arith.constant 0 : i32
      %23 = tpu.memref_slice %arg4[%c0_i32_28, %c0_i32_29] : memref<32x16xf32, #tpu.memory_space<any>> -> memref<1x16xf32, #tpu.memory_space<any>>
      %c0_i32_30 = arith.constant 0 : i32
      %24 = tpu.memref_slice %arg11[%22, %c0_i32_30] : memref<8x16xf32, #tpu.memory_space<vmem>> -> memref<1x16xf32, #tpu.memory_space<vmem>>
      %25 = tpu.memref_slice %arg12[%c1_i32_27] : memref<2x!tpu.dma_semaphore, #tpu.memory_space<semaphore_mem>> -> memref<1x!tpu.dma_semaphore, #tpu.memory_space<semaphore_mem>>
      %26 = tpu.memref_squeeze %25 : memref<1x!tpu.dma_semaphore, #tpu.memory_space<semaphore_mem>> -> memref<!tpu.dma_semaphore, #tpu.memory_space<semaphore_mem>>
      tpu.wait_dma2 semaphore(%26 : memref<!tpu.dma_semaphore, #tpu.memory_space<semaphore_mem>>) src(%23 : memref<1x16xf32, #tpu.memory_space<any>>) dst(%24 : memref<1x16xf32, #tpu.memory_space<vmem>>)
      %27 = arith.addi %0, %22 : i32
      %28 = arith.index_cast %27 : i32 to index
      %29 = memref.load %arg2[%28] : memref<16xi32, #tpu.memory_space<smem>>
      %c0_i32_31 = arith.constant 0 : i32
      %30 = arith.cmpi eq, %29, %c0_i32_31 : i32
      %31 = arith.extui %30 : i1 to i32
      %c0_i32_32 = arith.constant 0 : i32
      %32 = arith.cmpi ne, %31, %c0_i32_32 : i32
      scf.if %32 {
        %c0_i32_33 = arith.constant 0 : i32
        %c0_i32_34 = arith.constant 0 : i32
        %c0_i32_35 = arith.constant 0 : i32
        %33 = tpu.memref_slice %arg3[%c0_i32_34, %c0_i32_35] : memref<32x32xf32, #tpu.memory_space<any>> -> memref<1x32xf32, #tpu.memory_space<any>>
        %c0_i32_36 = arith.constant 0 : i32
        %34 = tpu.memref_slice %arg10[%22, %c0_i32_36] : memref<8x32xf32, #tpu.memory_space<vmem>> -> memref<1x32xf32, #tpu.memory_space<vmem>>
        %35 = tpu.memref_slice %arg12[%c0_i32_33] : memref<2x!tpu.dma_semaphore, #tpu.memory_space<semaphore_mem>> -> memref<1x!tpu.dma_semaphore, #tpu.memory_space<semaphore_mem>>
        %36 = tpu.memref_squeeze %35 : memref<1x!tpu.dma_semaphore, #tpu.memory_space<semaphore_mem>> -> memref<!tpu.dma_semaphore, #tpu.memory_space<semaphore_mem>>
        tpu.wait_dma2 semaphore(%36 : memref<!tpu.dma_semaphore, #tpu.memory_space<semaphore_mem>>) src(%33 : memref<1x32xf32, #tpu.memory_space<any>>) dst(%34 : memref<1x32xf32, #tpu.memory_space<vmem>>)
      } else {
      }
    }
    %c8_i32_6 = arith.constant 8 : i32
    %c0_7 = arith.constant 0 : index
    %c0_8 = arith.constant 0 : index
    %5 = vector.load %arg11[%c0_7, %c0_8] : memref<8x16xf32, #tpu.memory_space<vmem>>, vector<8x16xf32>
    %c0_9 = arith.constant 0 : index
    %c0_10 = arith.constant 0 : index
    %6 = vector.load %arg5[%c0_9, %c0_10] : memref<16x32xf32, #tpu.memory_space<vmem>>, vector<16x32xf32>
    %cst_11 = arith.constant dense<0.000000e+00> : vector<8x32xf32>
    %7 = tpu.matmul %5, %6, %cst_11 {dimension_numbers = #tpu.dot_dimension_numbers<[1], [0], [0], [1], [0, 0, 1, 1], [], []>} : vector<8x16xf32>, vector<16x32xf32>, vector<8x32xf32> -> vector<8x32xf32>
    %c0_12 = arith.constant 0 : index
    %c0_13 = arith.constant 0 : index
    %8 = vector.load %arg6[%c0_12, %c0_13] : memref<1x32xf32, #tpu.memory_space<vmem>>, vector<1x32xf32>
    %9 = vector.broadcast %8 : vector<1x32xf32> to vector<8x32xf32>
    %10 = arith.addf %7, %9 : vector<8x32xf32>
    %cst_14 = arith.constant 0.000000e+00 : f32
    %11 = vector.broadcast %cst_14 : f32 to vector<8x32xf32>
    %12 = arith.maximumf %10, %11 : vector<8x32xf32>
    %c0_15 = arith.constant 0 : index
    %c0_16 = arith.constant 0 : index
    %13 = vector.load %arg7[%c0_15, %c0_16] : memref<32x32xf32, #tpu.memory_space<vmem>>, vector<32x32xf32>
    %cst_17 = arith.constant dense<0.000000e+00> : vector<8x32xf32>
    %14 = tpu.matmul %12, %13, %cst_17 {dimension_numbers = #tpu.dot_dimension_numbers<[1], [0], [0], [1], [0, 0, 1, 1], [], []>} : vector<8x32xf32>, vector<32x32xf32>, vector<8x32xf32> -> vector<8x32xf32>
    %c0_18 = arith.constant 0 : index
    %c0_19 = arith.constant 0 : index
    %15 = vector.load %arg8[%c0_18, %c0_19] : memref<1x32xf32, #tpu.memory_space<vmem>>, vector<1x32xf32>
    %16 = vector.broadcast %15 : vector<1x32xf32> to vector<8x32xf32>
    %17 = arith.addf %14, %16 : vector<8x32xf32>
    %c0_20 = arith.constant 0 : index
    %c0_21 = arith.constant 0 : index
    %18 = vector.load %arg10[%c0_20, %c0_21] : memref<8x32xf32, #tpu.memory_space<vmem>>, vector<8x32xf32>
    %c0_22 = arith.constant 0 : index
    %c0_23 = arith.constant 0 : index
    %19 = vector.load %arg9[%c0_22, %c0_23] : memref<8x64xf32, #tpu.memory_space<vmem>>, vector<8x32xf32>
    tpu.vector_store %arg9[%c0_22, %c0_23], %18 {strides = array<i32>} : memref<8x64xf32, #tpu.memory_space<vmem>>, vector<8x32xf32>,
    %c0_24 = arith.constant 0 : index
    %c32 = arith.constant 32 : index
    %20 = vector.load %arg9[%c0_24, %c32] : memref<8x64xf32, #tpu.memory_space<vmem>>, vector<8x32xf32>
    tpu.vector_store %arg9[%c0_24, %c32], %17 {strides = array<i32>} : memref<8x64xf32, #tpu.memory_space<vmem>>, vector<8x32xf32>,
    return
  }
  func.func @transform_2(%arg0: i32, %arg1: memref<16xi32, #tpu.memory_space<smem>>, %arg2: memref<16xi32, #tpu.memory_space<smem>>) -> (i32, i32) {
    %c0_i32 = arith.constant 0 : i32
    %c0_i32_0 = arith.constant 0 : i32
    %c0_i32_1 = arith.constant 0 : i32
    return %c0_i32, %c0_i32_0 : i32, i32
  }
  func.func @transform_3(%arg0: i32, %arg1: memref<16xi32, #tpu.memory_space<smem>>, %arg2: memref<16xi32, #tpu.memory_space<smem>>) -> (i32, i32) {
    %c0_i32 = arith.constant 0 : i32
    %c0_i32_0 = arith.constant 0 : i32
    %c0_i32_1 = arith.constant 0 : i32
    return %c0_i32, %c0_i32_0 : i32, i32
  }
  func.func @transform_4(%arg0: i32, %arg1: memref<16xi32, #tpu.memory_space<smem>>, %arg2: memref<16xi32, #tpu.memory_space<smem>>) -> (i32, i32) {
    %c0_i32 = arith.constant 0 : i32
    %c0_i32_0 = arith.constant 0 : i32
    %c0_i32_1 = arith.constant 0 : i32
    return %c0_i32, %c0_i32_0 : i32, i32
  }
  func.func @transform_5(%arg0: i32, %arg1: memref<16xi32, #tpu.memory_space<smem>>, %arg2: memref<16xi32, #tpu.memory_space<smem>>) -> (i32, i32) {
    %c0_i32 = arith.constant 0 : i32
    %c0_i32_0 = arith.constant 0 : i32
    %c0_i32_1 = arith.constant 0 : i32
    return %c0_i32, %c0_i32_0 : i32, i32
  }
  func.func @transform_6(%arg0: i32, %arg1: memref<16xi32, #tpu.memory_space<smem>>, %arg2: memref<16xi32, #tpu.memory_space<smem>>) -> (i32, i32) {
    %c0_i32 = arith.constant 0 : i32
    %c0_i32_0 = arith.constant 0 : i32
    return %arg0, %c0_i32 : i32, i32
  }
}

</mosaic_0001>

<llo_original>
// kernel: tpu_custom_call.1
$region0: #{tpu_custom_call.1}
  #allocation0 [shape = 'u32[]', space=smem, size = 0x4, offset = 0x4, fixed_abs, tag = 'smem constant byte address 0x4 - core index']
  #allocation1 [shape = 'u32[144,128]{1,0:T(1,128)}', space=vmem, size = 0x12000, scoped, tag = 'internal scratch']
  #allocation2 [shape = 'f32[8,32]{1,0:T(8,128)}', space=vmem, size = 0x1000, scoped, tag = 'scratch operand']
  #allocation3 [shape = 'f32[8,16]{1,0:T(8,128)}', space=vmem, size = 0x1000, scoped, tag = 'scratch operand']
  #allocation4 [shape = 's32[2]{0}', space=sflag, size = 0x8, scoped, tag = 'scratch operand']
  #allocation5 [shape = 's32[1]{0}', space=sflag, size = 0x4, scoped, tag = 'scoped memory for tpu_custom_call.1']
  #allocation6 [shape = 'u8[512]{0}', space=smem, size = 0x200, scoped, tag = 'prefetched SMEM operand 0']
  #allocation7 [shape = 'u8[512]{0}', space=smem, size = 0x200, scoped, tag = 'prefetched SMEM operand 1']
  #allocation14 [shape = 's32[]', space=sflag, size = 0x4, offset = 0, fixed_abs, tag = 'sflag constant byte address 0x0 - dummy sync flag']
  #allocation15 [shape = 's32[]', space=sflag, size = 0x4, offset = 0, fixed_abs, tag = 'sflag constant byte address 0x0 - dummy sync flag']
  %s0 = inlined_call_operand.vmem [shape: s32[16], index: 0, kind: input, shape index: {}]
  %s1 = inlined_call_operand.vmem [shape: s32[16], index: 1, kind: input, shape index: {}]
  %s2 = inlined_call_operand.vmem [shape: f32[32,32], index: 2, kind: input, shape index: {}]
  %s3 = inlined_call_operand.vmem [shape: f32[32,16], index: 3, kind: input, shape index: {}]
  %s4 = inlined_call_operand.hbm [shape: f32[16,32], index: 4, kind: input, shape index: {}]
  %s5 = inlined_call_operand.hbm [shape: f32[1,32], index: 5, kind: input, shape index: {}]
  %s6 = inlined_call_operand.vmem [shape: f32[32,32], index: 6, kind: input, shape index: {}]
  %s7 = inlined_call_operand.vmem [shape: f32[1,32], index: 7, kind: input, shape index: {}]
  %s8 = inlined_call_operand.hbm [shape: f32[16,64], index: 8, kind: output, shape index: {}]
  %s9 = sld [smem:[#allocation0]]
  $region139: #{tpu_custom_call.1} parent=0
    _
  %s11 = ssub.s32 1, %s9
  %s12 = scalar_select 0, %s11, %s9
  %s13 = sshll.u32 %s0, 4
  %s14 = int_to_ptr.vmem [resolvable:$true] %s13
  %16 = dma.vmem_to_smem %s14, 16, [#allocation6], [#allocation5]
  %s17 = sshll.u32 %s1, 4
  %s18 = int_to_ptr.vmem [resolvable:$true] %s17
  %20 = dma.vmem_to_smem %s18, 16, [#allocation7], [#allocation5]
  %21 = dma.done [#allocation5], 32
  %22 = sfence
  $region1: #{tpu_custom_call.1} parent=0
    #allocation8 [shape = 'u8[8192]{0}', space=vmem, size = 0x2000, scoped, tag = 'input window, operand 4, single buffered']
    #allocation9 [shape = 's32[2]{0}', space=sflag, size = 0x8, scoped, tag = 'scoped memory for tpu_custom_call.1']
    #allocation10 [shape = 's32[2]{0}', space=sflag, size = 0x8, scoped, tag = 'scoped memory for tpu_custom_call.1']
    #allocation11 [shape = 'u8[512]{0}', space=vmem, size = 0x400, scoped, tag = 'input window, operand 5, single buffered']
    #allocation12 [shape = 's32[1]{0}', space=sflag, size = 0x4, scoped, tag = 'scoped memory for tpu_custom_call.1']
    #allocation13 [shape = 'u8[8192]{0}', space=vmem, size = 0x2000, scoped, tag = 'output window, operand 0']
    %23 = vsyncpa [#allocation9], 0
    %24 = vsyncpa [#allocation12], 0
    %25 = vsyncpa [#allocation10], 0
    %s26 = scalar_lea.sflag [#allocation10], 1
    %27 = vsyncpa %s26, 0
    loop: start=0, step=1, limit=4
    $region2: #{tpu_custom_call.1} parent=1 // loop_pre_header
      _
    $region3: #{tpu_custom_call.1} parent=1 // loop_header
      %s29 = sphi 0, %s33
      %p30 = scmp.ge.s32.totalorder %s29, 4
      %s37 = sphi 0, %s37
      %s39 = sphi 0, %s37
      %s40 = sphi 0, %s39
      %s54 = sphi 0, %s40
      %s58 = sphi 0, %s58
      %s60 = sphi 0, %s58
      %s61 = sphi 0, %s60
      %s75 = sphi 0, %s61
      %s79 = sphi 0, %s79
      %s81 = sphi 0, %s79
      %s82 = sphi 0, %s81
      %s96 = sphi 0, %s82
      %s100 = sphi 0, %s100
      %s102 = sphi 0, %s100
      %s103 = sphi 0, %s102
      %s117 = sphi 0, %s103
      %s123 = sphi 0, %s125
      %s126 = sphi 0, %s123
      %s127 = sphi 0, %s126
      %s143 = sphi 0, %s127
    $region4: #{tpu_custom_call.1} parent=1 // loop_header_branch
      %32 = sbr.rel (%p30) target = $region8
    $region5: #{tpu_custom_call.1} parent=1 // loop_body
      %s34 = ssub.s32 %s29, 1
      %s35 = ssub.s32 %s29, 2
      %s36 = sadd.s32 %s29, 1
      %s38 = sadd.s32 %s37, 1
      %p41 = scmp.eq.s32.totalorder %s29, 1
      %p42 = scmp.ne.s32.totalorder %s37, %s39
      %p43 = scmp.eq.s32.totalorder %s29, 0
      %p44 = por %p42, %p43
      %p45 = scmp.ne.s32.totalorder %s37, %s39
      %p46 = scmp.eq.s32.totalorder %s34, 1
      %p47 = por %p45, %p46
      %p48 = scmp.ne.s32.totalorder %s39, %s40
      %p49 = scmp.eq.s32.totalorder %s34, 0
      %p50 = por %p48, %p49
      %p51 = scmp.ne.s32.totalorder %s39, %s40
      %p52 = scmp.eq.s32.totalorder %s35, 1
      %p53 = por %p51, %p52
      %p55 = scmp.ne.s32.totalorder %s40, %s54
      %p56 = scmp.eq.s32.totalorder %s35, 0
      %p57 = por %p55, %p56
      %s59 = sadd.s32 %s58, 1
      %p62 = scmp.eq.s32.totalorder %s29, 1
      %p63 = scmp.ne.s32.totalorder %s58, %s60
      %p64 = scmp.eq.s32.totalorder %s29, 0
      %p65 = por %p63, %p64
      %p66 = scmp.ne.s32.totalorder %s58, %s60
      %p67 = scmp.eq.s32.totalorder %s34, 1
      %p68 = por %p66, %p67
      %p69 = scmp.ne.s32.totalorder %s60, %s61
      %p70 = scmp.eq.s32.totalorder %s34, 0
      %p71 = por %p69, %p70
      %p72 = scmp.ne.s32.totalorder %s60, %s61
      %p73 = scmp.eq.s32.totalorder %s35, 1
      %p74 = por %p72, %p73
      %p76 = scmp.ne.s32.totalorder %s61, %s75
      %p77 = scmp.eq.s32.totalorder %s35, 0
      %p78 = por %p76, %p77
      %s80 = sadd.s32 %s79, 1
      %p83 = scmp.eq.s32.totalorder %s29, 1
      %p84 = scmp.ne.s32.totalorder %s79, %s81
      %p85 = scmp.eq.s32.totalorder %s29, 0
      %p86 = por %p84, %p85
      %p87 = scmp.ne.s32.totalorder %s79, %s81
      %p88 = scmp.eq.s32.totalorder %s34, 1
      %p89 = por %p87, %p88
      %p90 = scmp.ne.s32.totalorder %s81, %s82
      %p91 = scmp.eq.s32.totalorder %s34, 0
      %p92 = por %p90, %p91
      %p93 = scmp.ne.s32.totalorder %s81, %s82
      %p94 = scmp.eq.s32.totalorder %s35, 1
      %p95 = por %p93, %p94
      %p97 = scmp.ne.s32.totalorder %s82, %s96
      %p98 = scmp.eq.s32.totalorder %s35, 0
      %p99 = por %p97, %p98
      %s101 = sadd.s32 %s100, 1
      %p104 = scmp.eq.s32.totalorder %s29, 1
      %p105 = scmp.ne.s32.totalorder %s100, %s102
      %p106 = scmp.eq.s32.totalorder %s29, 0
      %p107 = por %p105, %p106
      %p108 = scmp.ne.s32.totalorder %s100, %s102
      %p109 = scmp.eq.s32.totalorder %s34, 1
      %p110 = por %p108, %p109
      %p111 = scmp.ne.s32.totalorder %s102, %s103
      %p112 = scmp.eq.s32.totalorder %s34, 0
      %p113 = por %p111, %p112
      %p114 = scmp.ne.s32.totalorder %s102, %s103
      %p115 = scmp.eq.s32.totalorder %s35, 1
      %p116 = por %p114, %p115
      %p118 = scmp.ne.s32.totalorder %s103, %s117
      %p119 = scmp.eq.s32.totalorder %s35, 0
      %p120 = por %p118, %p119
      %s121 = ssub.s32 %s29, %s36
      %p122 = scmp.eq.s32.totalorder %s121, 0
      %s124 = sadd.s32 %s123, 1
      %s125 = scalar_select %p122, %s123, %s124
      %p128 = pneg %p122
      %p129 = scmp.eq.s32.totalorder %s29, 1
      %p130 = por %p128, %p129
      %p131 = scmp.ne.s32.totalorder %s123, %s126
      %p132 = scmp.eq.s32.totalorder %s29, 0
      %p133 = por %p131, %p132
      %p134 = scmp.ne.s32.totalorder %s123, %s126
      %p135 = scmp.eq.s32.totalorder %s34, 1
      %p136 = por %p134, %p135
      %p137 = scmp.ne.s32.totalorder %s126, %s127
      %p138 = scmp.eq.s32.totalorder %s34, 0
      %p139 = por %p137, %p138
      %p140 = scmp.ne.s32.totalorder %s126, %s127
      %p141 = scmp.eq.s32.totalorder %s35, 1
      %p142 = por %p140, %p141
      %p144 = scmp.ne.s32.totalorder %s127, %s143
      %p145 = scmp.eq.s32.totalorder %s35, 0
      %p146 = por %p144, %p145
      %p147 = scmp.le.s32.totalorder 1, %s29
      %p148 = scmp.lt.s32.totalorder %s29, 3
      %p149 = pnand %p147, %p148
      %p150 = pneg %p149
      // Predicated region
      $region9: #{tpu_custom_call.1} parent=5 // pred_check
        _
      $region10: #{tpu_custom_call.1} parent=5 // pred_check_branch
        %152 = sbr.rel (%p149) target = $region12
      $region11: #{tpu_custom_call.1} parent=5 // pred_region
        %s153 = ssub.s32 %s29, 1
        // Predicated region
        $region13: #{tpu_custom_call.1} parent=11 // pred_check
          %p154 = pneg %p50
        $region14: #{tpu_custom_call.1} parent=11 // pred_check_branch
          %156 = sbr.rel (%p154) target = $region16
        $region15: #{tpu_custom_call.1} parent=11 // pred_region
          %s158 = ssub.s32 256, 256
          %159 = vsyncadd [#allocation9], %s158
          %s160 = sshll.u32 [#allocation8], 4
          %s161 = int_to_ptr.vmem [resolvable:$true] %s160
          %166 = dma.hbm_to_vmem [thread:$0]  %s4, 256, %s161, [#allocation9], 128, 128, 8
        $region16: #{tpu_custom_call.1} parent=11 // pred_fallthru
          _
        // Predicated region
        $region17: #{tpu_custom_call.1} parent=11 // pred_check
          %p167 = pneg %p71
        $region18: #{tpu_custom_call.1} parent=11 // pred_check_branch
          %169 = sbr.rel (%p167) target = $region20
        $region19: #{tpu_custom_call.1} parent=11 // pred_region
          %s171 = ssub.s32 16, 16
          %172 = vsyncadd [#allocation12], %s171
          %s174 = sshll.u32 [#allocation11], 4
          %s175 = int_to_ptr.vmem [resolvable:$true] %s174
          %177 = dma.hbm_to_vmem [thread:$0]  %s5, 16, %s175, [#allocation12]
        $region20: #{tpu_custom_call.1} parent=11 // pred_fallthru
          _
        // Predicated region
        $region21: #{tpu_custom_call.1} parent=11 // pred_check
          %p178 = pneg %p92
        $region22: #{tpu_custom_call.1} parent=11 // pred_check_branch
          %180 = sbr.rel (%p178) target = $region24
        $region23: #{tpu_custom_call.1} parent=11 // pred_region
          _
        $region24: #{tpu_custom_call.1} parent=11 // pred_fallthru
          _
        // Predicated region
        $region25: #{tpu_custom_call.1} parent=11 // pred_check
          %p181 = pneg %p113
        $region26: #{tpu_custom_call.1} parent=11 // pred_check_branch
          %183 = sbr.rel (%p181) target = $region28
        $region27: #{tpu_custom_call.1} parent=11 // pred_region
          _
        $region28: #{tpu_custom_call.1} parent=11 // pred_fallthru
          _
      $region12: #{tpu_custom_call.1} parent=5 // pred_fallthru
        _
      %p184 = scmp.lt.s32.totalorder %s29, 2
      // Predicated region
      $region29: #{tpu_custom_call.1} parent=5 // pred_check
        %p185 = pneg %p184
      $region30: #{tpu_custom_call.1} parent=5 // pred_check_branch
        %187 = sbr.rel (%p185) target = $region32
      $region31: #{tpu_custom_call.1} parent=5 // pred_region
        _
      $region32: #{tpu_custom_call.1} parent=5 // pred_fallthru
        _
      %p188 = scmp.le.s32.totalorder 1, %s29
      %p189 = scmp.lt.s32.totalorder %s29, 3
      %p190 = pnand %p188, %p189
      %p191 = pneg %p190
      // Predicated region
      $region33: #{tpu_custom_call.1} parent=5 // pred_check
        _
      $region34: #{tpu_custom_call.1} parent=5 // pred_check_branch
        %193 = sbr.rel (%p190) target = $region36
      $region35: #{tpu_custom_call.1} parent=5 // pred_region
        %s194 = ssub.s32 %s29, 1
        // Predicated region
        $region37: #{tpu_custom_call.1} parent=35 // pred_check
          %p195 = pneg %p50
        $region38: #{tpu_custom_call.1} parent=35 // pred_check_branch
          %197 = sbr.rel (%p195) target = $region40
        $region39: #{tpu_custom_call.1} parent=35 // pred_region
          %198 = dma.done [#allocation9], 256
        $region40: #{tpu_custom_call.1} parent=35 // pred_fallthru
          _
        // Predicated region
        $region41: #{tpu_custom_call.1} parent=35 // pred_check
          %p199 = pneg %p71
        $region42: #{tpu_custom_call.1} parent=35 // pred_check_branch
          %201 = sbr.rel (%p199) target = $region44
        $region43: #{tpu_custom_call.1} parent=35 // pred_region
          %202 = dma.done [#allocation12], 16
        $region44: #{tpu_custom_call.1} parent=35 // pred_fallthru
          _
        %p203 = pneg %p50
        %p204 = pneg %p47
        %p205 = pneg %p71
        %p206 = pneg %p68
        %p207 = pneg %p92
        %p208 = pneg %p89
        %p209 = pneg %p113
        %p210 = pneg %p110
        %p211 = pneg %p139
        %p212 = pneg %p136
        %s213 = sand.u32 %s126, 1
        %s214 = scalar_lea.sflag [#allocation10], %s213
        %s215 = sand.u32 %s126, 1
        %s216 = smul.addr %s215, 8
        %s217 = scalar_lea.vmem [#allocation13], %s216
        %s218 = smul.u32 %s34, 8
        %vm219 = vcmask 261120
        %220 = vst.msk [vmem:[#allocation2] sm:$0xff] %vm219, 0.0
        loop: start=0, step=1, limit=8
        $region45: #{tpu_custom_call.1} parent=35 // loop_pre_header
          _
        $region46: #{tpu_custom_call.1} parent=35 // loop_header
          %s222 = sphi 0, %s226
          %p223 = scmp.ge.s32.totalorder %s222, 8
        $region47: #{tpu_custom_call.1} parent=35 // loop_header_branch
          %225 = sbr.rel (%p223) target = $region51
        $region48: #{tpu_custom_call.1} parent=35 // loop_body
          %s227 = sadd.s32 %s218, %s222
          %s228 = sld [smem:[#allocation6 + %s227]]
          %s229 = scalar_lea.vmem %s3, %s228
          %s230 = scalar_lea.vmem [#allocation3], %s222
          %s231 = scalar_lea.sflag [#allocation4], 1
          %p233 = scmp.lt.u32.totalorder 1, 8
          %p234 = pneg %p233
          // Predicated region
          $region52: #{tpu_custom_call.1} parent=48 // pred_check
            _
          $region53: #{tpu_custom_call.1} parent=48 // pred_check_branch
            %236 = sbr.rel (%p233) target = $region55
          $region54: #{tpu_custom_call.1} parent=48 // pred_region
            %s251 = sand.u32 1, 7
            %p252 = scmp.eq.s32.totalorder %s251, 0
            %p253 = pneg %p252
            // Predicated region
            $region67: #{tpu_custom_call.1} parent=54 // pred_check
              _
            $region68: #{tpu_custom_call.1} parent=54 // pred_check_branch
              %255 = sbr.rel (%p252) target = $region70
            $region69: #{tpu_custom_call.1} parent=54 // pred_region
              %s256 = sand.u32 1, 7
              %s257 = ssub.s32 1, %s256
              %s258 = scalar_lea.vmem %s229, %s257
              %s259 = ssub.s32 1, %s256
              %s260 = scalar_lea.vmem %s230, %s259 [#allocation3]
              %s261 = sshllo.u32 0, %s256
              loop: start=0, step=1, limit=1
              $region71: #{tpu_custom_call.1} parent=69 // loop_pre_header
                _
              $region72: #{tpu_custom_call.1} parent=69 // loop_header
                %s263 = sphi 0, %s267
                %p264 = scmp.ge.s32.totalorder %s263, 1
                %s268 = sphi %s258, %s258
                %s269 = sphi %s260, %s260
              $region73: #{tpu_custom_call.1} parent=69 // loop_header_branch
                %266 = sbr.rel (%p264) target = $region77
              $region74: #{tpu_custom_call.1} parent=69 // loop_body
                %v270 = vld [vmem:[%s268] sm:%s261]
                %271 = vst [vmem:[%s269] sm:%s261] %v270
              $region75: #{tpu_custom_call.1} parent=69 // loop_footer
                %s267 = sadd.s32 1, %s263
              $region76: #{tpu_custom_call.1} parent=69 // loop_footer_branch
                %262 = sbr.rel target = $region72
              $region77: #{tpu_custom_call.1} parent=69 // loop_exit
                _
            $region70: #{tpu_custom_call.1} parent=54 // pred_fallthru
              _
          $region55: #{tpu_custom_call.1} parent=48 // pred_fallthru
            _
          // Predicated region
          $region56: #{tpu_custom_call.1} parent=48 // pred_check
            %p237 = pneg %p233
          $region57: #{tpu_custom_call.1} parent=48 // pred_check_branch
            %239 = sbr.rel (%p237) target = $region59
          $region58: #{tpu_custom_call.1} parent=48 // pred_region
            %s240 = sshllo.u32 0, 1
            loop: start=0, step=1, limit=1
            $region60: #{tpu_custom_call.1} parent=58 // loop_pre_header
              _
            $region61: #{tpu_custom_call.1} parent=58 // loop_header
              %s242 = sphi 0, %s246
              %p243 = scmp.ge.s32.totalorder %s242, 1
              %s247 = sphi %s229, %s229
              %s248 = sphi %s230, %s230
            $region62: #{tpu_custom_call.1} parent=58 // loop_header_branch
              %245 = sbr.rel (%p243) target = $region66
            $region63: #{tpu_custom_call.1} parent=58 // loop_body
              %v249 = vld [vmem:[%s247] sm:%s240]
              %250 = vst [vmem:[%s248] sm:%s240] %v249
            $region64: #{tpu_custom_call.1} parent=58 // loop_footer
              %s246 = sadd.s32 1, %s242
            $region65: #{tpu_custom_call.1} parent=58 // loop_footer_branch
              %241 = sbr.rel target = $region61
            $region66: #{tpu_custom_call.1} parent=58 // loop_exit
              _
          $region59: #{tpu_custom_call.1} parent=48 // pred_fallthru
            _
          // Predicated region
          $region78: #{tpu_custom_call.1} parent=48 // pred_check
            _
          $region79: #{tpu_custom_call.1} parent=48 // pred_check_branch
            %274 = sbr.rel (0) target = $region81
          $region80: #{tpu_custom_call.1} parent=48 // pred_region
            %275 = vsyncadd %s231, 16
          $region81: #{tpu_custom_call.1} parent=48 // pred_fallthru
            _
          %s276 = sld [smem:[#allocation7 + %s227]]
          %p277 = scmp.eq.s32.totalorder %s276, 0
          // Predicated region
          $region82: #{tpu_custom_call.1} parent=48 // pred_check
            %p278 = pneg %p277
          $region83: #{tpu_custom_call.1} parent=48 // pred_check_branch
            %280 = sbr.rel (%p278) target = $region85
          $region84: #{tpu_custom_call.1} parent=48 // pred_region
            %s281 = scalar_lea.vmem %s2, %s228
            %s282 = scalar_lea.vmem [#allocation2], %s222
            %p284 = scmp.lt.u32.totalorder 1, 8
            %p285 = pneg %p284
            // Predicated region
            $region86: #{tpu_custom_call.1} parent=84 // pred_check
              _
            $region87: #{tpu_custom_call.1} parent=84 // pred_check_branch
              %287 = sbr.rel (%p284) target = $region89
            $region88: #{tpu_custom_call.1} parent=84 // pred_region
              %s302 = sand.u32 1, 7
              %p303 = scmp.eq.s32.totalorder %s302, 0
              %p304 = pneg %p303
              // Predicated region
              $region101: #{tpu_custom_call.1} parent=88 // pred_check
                _
              $region102: #{tpu_custom_call.1} parent=88 // pred_check_branch
                %306 = sbr.rel (%p303) target = $region104
              $region103: #{tpu_custom_call.1} parent=88 // pred_region
                %s307 = sand.u32 1, 7
                %s308 = ssub.s32 1, %s307
                %s309 = scalar_lea.vmem %s281, %s308
                %s310 = ssub.s32 1, %s307
                %s311 = scalar_lea.vmem %s282, %s310 [#allocation2]
                %s312 = sshllo.u32 0, %s307
                loop: start=0, step=1, limit=1
                $region105: #{tpu_custom_call.1} parent=103 // loop_pre_header
                  _
                $region106: #{tpu_custom_call.1} parent=103 // loop_header
                  %s314 = sphi 0, %s318
                  %p315 = scmp.ge.s32.totalorder %s314, 1
                  %s319 = sphi %s309, %s309
                  %s320 = sphi %s311, %s311
                $region107: #{tpu_custom_call.1} parent=103 // loop_header_branch
                  %317 = sbr.rel (%p315) target = $region111
                $region108: #{tpu_custom_call.1} parent=103 // loop_body
                  %v321 = vld [vmem:[%s319] sm:%s312]
                  %322 = vst [vmem:[%s320] sm:%s312] %v321
                $region109: #{tpu_custom_call.1} parent=103 // loop_footer
                  %s318 = sadd.s32 1, %s314
                $region110: #{tpu_custom_call.1} parent=103 // loop_footer_branch
                  %313 = sbr.rel target = $region106
                $region111: #{tpu_custom_call.1} parent=103 // loop_exit
                  _
              $region104: #{tpu_custom_call.1} parent=88 // pred_fallthru
                _
            $region89: #{tpu_custom_call.1} parent=84 // pred_fallthru
              _
            // Predicated region
            $region90: #{tpu_custom_call.1} parent=84 // pred_check
              %p288 = pneg %p284
            $region91: #{tpu_custom_call.1} parent=84 // pred_check_branch
              %290 = sbr.rel (%p288) target = $region93
            $region92: #{tpu_custom_call.1} parent=84 // pred_region
              %s291 = sshllo.u32 0, 1
              loop: start=0, step=1, limit=1
              $region94: #{tpu_custom_call.1} parent=92 // loop_pre_header
                _
              $region95: #{tpu_custom_call.1} parent=92 // loop_header
                %s293 = sphi 0, %s297
                %p294 = scmp.ge.s32.totalorder %s293, 1
                %s298 = sphi %s281, %s281
                %s299 = sphi %s282, %s282
              $region96: #{tpu_custom_call.1} parent=92 // loop_header_branch
                %296 = sbr.rel (%p294) target = $region100
              $region97: #{tpu_custom_call.1} parent=92 // loop_body
                %v300 = vld [vmem:[%s298] sm:%s291]
                %301 = vst [vmem:[%s299] sm:%s291] %v300
              $region98: #{tpu_custom_call.1} parent=92 // loop_footer
                %s297 = sadd.s32 1, %s293
              $region99: #{tpu_custom_call.1} parent=92 // loop_footer_branch
                %292 = sbr.rel target = $region95
              $region100: #{tpu_custom_call.1} parent=92 // loop_exit
                _
            $region93: #{tpu_custom_call.1} parent=84 // pred_fallthru
              _
            // Predicated region
            $region112: #{tpu_custom_call.1} parent=84 // pred_check
              _
            $region113: #{tpu_custom_call.1} parent=84 // pred_check_branch
              %325 = sbr.rel (0) target = $region115
            $region114: #{tpu_custom_call.1} parent=84 // pred_region
              %326 = vsyncadd [#allocation4], 16
            $region115: #{tpu_custom_call.1} parent=84 // pred_fallthru
              _
          $region85: #{tpu_custom_call.1} parent=48 // pred_fallthru
            _
        $region49: #{tpu_custom_call.1} parent=35 // loop_footer
          %s226 = sadd.s32 1, %s222
        $region50: #{tpu_custom_call.1} parent=35 // loop_footer_branch
          %221 = sbr.rel target = $region46
        $region51: #{tpu_custom_call.1} parent=35 // loop_exit
          _
        loop: start=0, step=1, limit=8
        $region116: #{tpu_custom_call.1} parent=35 // loop_pre_header
          _
        $region117: #{tpu_custom_call.1} parent=35 // loop_header
          %s328 = sphi 0, %s332
          %p329 = scmp.ge.s32.totalorder %s328, 8
        $region118: #{tpu_custom_call.1} parent=35 // loop_header_branch
          %331 = sbr.rel (%p329) target = $region122
        $region119: #{tpu_custom_call.1} parent=35 // loop_body
          %s333 = scalar_lea.sflag [#allocation4], 1
          %s334 = smul.u32 1, 1
          %s335 = sshll.u32 %s334, 4
          %336 = dma.done %s333, %s335
          %s337 = sadd.s32 %s218, %s328
          %s338 = sld [smem:[#allocation7 + %s337]]
          %p339 = scmp.eq.s32.totalorder %s338, 0
          // Predicated region
          $region123: #{tpu_custom_call.1} parent=119 // pred_check
            %p340 = pneg %p339
          $region124: #{tpu_custom_call.1} parent=119 // pred_check_branch
            %342 = sbr.rel (%p340) target = $region126
          $region125: #{tpu_custom_call.1} parent=119 // pred_region
            %s343 = sshll.u32 %s334, 4
            %344 = dma.done [#allocation4], %s343
          $region126: #{tpu_custom_call.1} parent=119 // pred_fallthru
            _
        $region120: #{tpu_custom_call.1} parent=35 // loop_footer
          %s332 = sadd.s32 1, %s328
        $region121: #{tpu_custom_call.1} parent=35 // loop_footer_branch
          %327 = sbr.rel target = $region117
        $region122: #{tpu_custom_call.1} parent=35 // loop_exit
          _
        %v345 = vld [vmem:[#allocation3] sm:$0xff]
        %v346 = vld [vmem:[#allocation8] sm:$0xff]
        %v347 = vld [vmem:[#allocation8 + $0x8] sm:$0xff]
        %v348 = vld [vmem:[#allocation11] sm:$0x1]
        %v350 = vlaneseq
        %v351 = vshrl.u32 %v350, 7
        %v352 = vsub.s32 0, %v351
        %v353 = vrot.slane %v348, %v352
        %vm355 = vcmask 130048
        %v357 = vsel %vm355, %v345, 0
        %359 = vmatprep.subr.mxu0 0.0
        %360 = vmatpush1.msra.mxu0 %v346
        %361 = vmatprep.subr.mxu0 0.0
        %362 = vmatpush1.msra.mxu0 %v347
        %363 = vmatprep.subr.mxu0 0.0
        %364 = vmatpush1.msra.mxu0 0.0
        %365 = vmatprep.subr.mxu0 0.0
        %366 = vmatpush1.msra.mxu0 0.0
        %367 = vmatprep.subr.mxu0 0.0
        %368 = vmatpush1.msra.mxu0 0.0
        %369 = vmatprep.subr.mxu0 0.0
        %370 = vmatpush1.msra.mxu0 0.0
        %371 = vmatprep.subr.mxu0 0.0
        %372 = vmatpush1.msra.mxu0 0.0
        %373 = vmatprep.subr.mxu0 0.0
        %374 = vmatpush1.msra.mxu0 0.0
        %375 = vmatprep.subr.mxu0 0.0
        %376 = vmatpush1.msra.mxu0 0.0
        %377 = vmatprep.subr.mxu0 0.0
        %378 = vmatpush1.msra.mxu0 0.0
        %379 = vmatprep.subr.mxu0 0.0
        %380 = vmatpush1.msra.mxu0 0.0
        %381 = vmatprep.subr.mxu0 0.0
        %382 = vmatpush1.msra.mxu0 0.0
        %383 = vmatprep.subr.mxu0 0.0
        %384 = vmatpush1.msra.mxu0 0.0
        %385 = vmatprep.subr.mxu0 0.0
        %386 = vmatpush1.msra.mxu0 0.0
        %387 = vmatprep.subr.mxu0 0.0
        %388 = vmatpush1.msra.mxu0 0.0
        %389 = vmatprep.subr.mxu0 0.0
        %390 = vmatpush1.msra.mxu0 0.0
        %391 = vmatprep.subr.mxu0 0.0
        %392 = vmatpush1.msra.mxu0 0.0
        %393 = vmatprep.subr.mxu0 0.0
        %394 = vmatpush1.msra.mxu0 0.0
        %395 = vmatprep.subr.mxu0 0.0
        %396 = vmatpush1.msra.mxu0 0.0
        %397 = vmatprep.subr.mxu0 0.0
        %398 = vmatpush1.msra.mxu0 0.0
        %399 = vmatprep.subr.mxu0 0.0
        %400 = vmatpush1.msra.mxu0 0.0
        %401 = vmatprep.subr.mxu0 0.0
        %402 = vmatpush1.msra.mxu0 0.0
        %403 = vmatprep.subr.mxu0 0.0
        %404 = vmatpush1.msra.mxu0 0.0
        %405 = vmatprep.subr.mxu0 0.0
        %406 = vmatpush1.msra.mxu0 0.0
        %407 = vmatprep.subr.mxu0 0.0
        %408 = vmatpush1.msra.mxu0 0.0
        %409 = vmatprep.subr.mxu0 0.0
        %410 = vmatpush1.msra.mxu0 0.0
        %411 = vmatprep.subr.mxu0 0.0
        %412 = vmatpush1.msra.mxu0 0.0
        %413 = vmatprep.subr.mxu0 0.0
        %414 = vmatpush1.msra.mxu0 0.0
        %415 = vmatprep.subr.mxu0 0.0
        %416 = vmatpush1.msra.mxu0 0.0
        %417 = vmatprep.subr.mxu0 0.0
        %418 = vmatpush1.msra.mxu0 0.0
        %419 = vmatprep.subr.mxu0 0.0
        %420 = vmatpush1.msra.mxu0 0.0
        %421 = vmatprep.subr.mxu0 0.0
        %422 = vmatpush1.msra.mxu0 0.0
        %423 = vmatprep.mubr.f32.mxu0 0.0
        %424 = vmatmul.mubr.f32.gmra.mrb[0].mxu0 %v357
        %v425 = vpop.f32.mrb[0].mxu0
        %v426 = vadd.f32 %v353, %v425
        %v427 = vpop.f32.mrb[0].mxu0
        %428 = vdwg.mxu0
        %v429 = vmax.f32 %v426, 0.0
        %v430 = vld [vmem:[%s6] sm:$0xff]
        %v431 = vld [vmem:[%s6 + $0x8] sm:$0xff]
        %v432 = vld [vmem:[%s6 + $0x10] sm:$0xff]
        %v433 = vld [vmem:[%s6 + $0x18] sm:$0xff]
        %v434 = vld [vmem:[%s7] sm:$0x1]
        %v436 = vlaneseq
        %v437 = vshrl.u32 %v436, 7
        %v438 = vsub.s32 0, %v437
        %v439 = vrot.slane %v434, %v438
        %v442 = vsel %vm219, %v429, 0
        %444 = vmatprep.subr.mxu0 0.0
        %445 = vmatpush1.msra.mxu0 %v430
        %446 = vmatprep.subr.mxu0 0.0
        %447 = vmatpush1.msra.mxu0 %v431
        %448 = vmatprep.subr.mxu0 0.0
        %449 = vmatpush1.msra.mxu0 %v432
        %450 = vmatprep.subr.mxu0 0.0
        %451 = vmatpush1.msra.mxu0 %v433
        %452 = vmatprep.subr.mxu0 0.0
        %453 = vmatpush1.msra.mxu0 0.0
        %454 = vmatprep.subr.mxu0 0.0
        %455 = vmatpush1.msra.mxu0 0.0
        %456 = vmatprep.subr.mxu0 0.0
        %457 = vmatpush1.msra.mxu0 0.0
        %458 = vmatprep.subr.mxu0 0.0
        %459 = vmatpush1.msra.mxu0 0.0
        %460 = vmatprep.subr.mxu0 0.0
        %461 = vmatpush1.msra.mxu0 0.0
        %462 = vmatprep.subr.mxu0 0.0
        %463 = vmatpush1.msra.mxu0 0.0
        %464 = vmatprep.subr.mxu0 0.0
        %465 = vmatpush1.msra.mxu0 0.0
        %466 = vmatprep.subr.mxu0 0.0
        %467 = vmatpush1.msra.mxu0 0.0
        %468 = vmatprep.subr.mxu0 0.0
        %469 = vmatpush1.msra.mxu0 0.0
        %470 = vmatprep.subr.mxu0 0.0
        %471 = vmatpush1.msra.mxu0 0.0
        %472 = vmatprep.subr.mxu0 0.0
        %473 = vmatpush1.msra.mxu0 0.0
        %474 = vmatprep.subr.mxu0 0.0
        %475 = vmatpush1.msra.mxu0 0.0
        %476 = vmatprep.subr.mxu0 0.0
        %477 = vmatpush1.msra.mxu0 0.0
        %478 = vmatprep.subr.mxu0 0.0
        %479 = vmatpush1.msra.mxu0 0.0
        %480 = vmatprep.subr.mxu0 0.0
        %481 = vmatpush1.msra.mxu0 0.0
        %482 = vmatprep.subr.mxu0 0.0
        %483 = vmatpush1.msra.mxu0 0.0
        %484 = vmatprep.subr.mxu0 0.0
        %485 = vmatpush1.msra.mxu0 0.0
        %486 = vmatprep.subr.mxu0 0.0
        %487 = vmatpush1.msra.mxu0 0.0
        %488 = vmatprep.subr.mxu0 0.0
        %489 = vmatpush1.msra.mxu0 0.0
        %490 = vmatprep.subr.mxu0 0.0
        %491 = vmatpush1.msra.mxu0 0.0
        %492 = vmatprep.subr.mxu0 0.0
        %493 = vmatpush1.msra.mxu0 0.0
        %494 = vmatprep.subr.mxu0 0.0
        %495 = vmatpush1.msra.mxu0 0.0
        %496 = vmatprep.subr.mxu0 0.0
        %497 = vmatpush1.msra.mxu0 0.0
        %498 = vmatprep.subr.mxu0 0.0
        %499 = vmatpush1.msra.mxu0 0.0
        %500 = vmatprep.subr.mxu0 0.0
        %501 = vmatpush1.msra.mxu0 0.0
        %502 = vmatprep.subr.mxu0 0.0
        %503 = vmatpush1.msra.mxu0 0.0
        %504 = vmatprep.subr.mxu0 0.0
        %505 = vmatpush1.msra.mxu0 0.0
        %506 = vmatprep.subr.mxu0 0.0
        %507 = vmatpush1.msra.mxu0 0.0
        %508 = vmatprep.mubr.f32.mxu0 0.0
        %509 = vmatmul.mubr.f32.gmra.mrb[0].mxu0 %v442
        %v510 = vpop.f32.mrb[0].mxu0
        %v511 = vadd.f32 %v439, %v510
        %v512 = vpop.f32.mrb[0].mxu0
        %513 = vdwg.mxu0
        %v514 = vld [vmem:[#allocation2] sm:$0xff]
        %515 = vst.msk [vmem:[%s217] sm:$0xff] %vm219, %v514
        %517 = vrot.lane.b32.xlu0 %v511, 32
        %v518 = vpop.permute.xlu0 %517
        %vm520 = vcmask 523520
        %521 = vst.msk [vmem:[%s217] sm:$0xff] %vm520, %v518
        %s522 = sand.u32 %s126, 1
        %s523 = scalar_lea.sflag [#allocation10], %s522
        %s524 = sand.u32 %s126, 1
        %s525 = smul.addr %s524, 8
        %s526 = scalar_lea.vmem [#allocation13], %s525
        // Predicated region
        $region127: #{tpu_custom_call.1} parent=35 // pred_check
          %p527 = pneg %p136
        $region128: #{tpu_custom_call.1} parent=35 // pred_check_branch
          %529 = sbr.rel (%p527) target = $region130
        $region129: #{tpu_custom_call.1} parent=35 // pred_region
          %s531 = ssub.s32 128, 128
          %532 = vsyncadd %s523, %s531
          %s533 = smul.addr %s34, 128
          %s534 = scalar_lea.hbm %s8, %s533
          %s536 = sshll.u32 %s526, 4
          %s537 = int_to_ptr.vmem [resolvable:$true] %s536
          %539 = dma.vmem_to_hbm [thread:$0]  %s537, 128, %s534, %s523
        $region130: #{tpu_custom_call.1} parent=35 // pred_fallthru
          _
      $region36: #{tpu_custom_call.1} parent=5 // pred_fallthru
        _
      %p540 = scmp.le.s32.totalorder 2, %s29
      // Predicated region
      $region131: #{tpu_custom_call.1} parent=5 // pred_check
        %p541 = pneg %p540
      $region132: #{tpu_custom_call.1} parent=5 // pred_check_branch
        %543 = sbr.rel (%p541) target = $region134
      $region133: #{tpu_custom_call.1} parent=5 // pred_region
        %s544 = ssub.s32 %s29, 2
        // Predicated region
        $region135: #{tpu_custom_call.1} parent=133 // pred_check
          %p545 = pneg %p142
        $region136: #{tpu_custom_call.1} parent=133 // pred_check_branch
          %547 = sbr.rel (%p545) target = $region138
        $region137: #{tpu_custom_call.1} parent=133 // pred_region
          %s548 = sand.u32 %s127, 1
          %s549 = scalar_lea.sflag [#allocation10], %s548
          %s550 = sand.u32 %s127, 1
          %s551 = smul.addr %s550, 8
          %s552 = scalar_lea.vmem [#allocation13], %s551
          %553 = dma.done %s549, 128
        $region138: #{tpu_custom_call.1} parent=133 // pred_fallthru
          _
      $region134: #{tpu_custom_call.1} parent=5 // pred_fallthru
        _
    $region6: #{tpu_custom_call.1} parent=1 // loop_footer
      %s33 = sadd.s32 1, %s29
    $region7: #{tpu_custom_call.1} parent=1 // loop_footer_branch
      %28 = sbr.rel target = $region3
    $region8: #{tpu_custom_call.1} parent=1 // loop_exit
      _
    %554 = vsyncpa [#allocation9], 1
    %s555 = scalar_lea.sflag [#allocation9], 1
    %556 = vsyncpa %s555, 1
    %557 = vsyncpa [#allocation12], 1
    %558 = vsyncpa [#allocation10], 1
    %s559 = scalar_lea.sflag [#allocation10], 1
    %560 = vsyncpa %s559, 1
  %561 = vsyncmov [#allocation4]
  %s562 = vpop.sfrf %561
  %p563 = scmp.eq.s32.totalorder %s562, 0
  %p564 = pneg %p563
  %566 = shalt.err (%p564)
  %s567 = scalar_lea.sflag [#allocation4], 1
  %568 = vsyncmov %s567
  %s569 = vpop.sfrf %568
  %p570 = scmp.eq.s32.totalorder %s569, 0
  %p571 = pneg %p570
  %573 = shalt.err (%p571)

</llo_original>
